<compile_context>
chip_gen: v6e
topology: v6e:2x2x1
jax: 0.10.0
libtpu: 0.0.40
codegen_flags: <defaults>
</compile_context>

<pallas_src>
import math

import jax
import jax.numpy as jnp
from jax.experimental import pallas as pl
from jax.experimental.pallas import tpu as pltpu


def _round_up(x, m):
    return ((x + m - 1) // m) * m


def _mlp_kernel(x_ref, w1_ref, b1_ref, w2_ref, b2_ref, o_ref):
    # x:  [TILE_N, H]   (bf16)   w1: [H, H/2] (bf16)   b1: [1, H/2] (f32)
    # w2: [H/2, T_pad]  (bf16)   b2: [1, T_pad] (f32)  o:  [TILE_N, T_pad] (f32)
    h = jnp.dot(x_ref[...], w1_ref[...], preferred_element_type=jnp.float32)
    h = jnp.maximum(h + b1_ref[...], 0.0)            # bias + ReLU in f32 (VPU)
    # dropout == identity (eval mode)
    out = jnp.dot(h.astype(w2_ref.dtype), w2_ref[...],
                  preferred_element_type=jnp.float32) + b2_ref[...]
    o_ref[...] = out.astype(o_ref.dtype)


def multi_nonlinear_classifier(x, w1, b1, w2, b2, *, tile_n=512,
                               compute_dtype=jnp.bfloat16):
    """x: [..., hidden]; w1: [hidden, hidden//2]; w2: [hidden//2, tag_size]."""
    hidden = x.shape[-1]
    h2 = w1.shape[-1]
    tag_size = w2.shape[-1]
    lead = x.shape[:-1]
    n = math.prod(lead) if lead else 1
    x2d = x.reshape(n, hidden)

    # Row tile: multiple of 8 (f32 sublane), no bigger than the padded N.
    # Default 512 keeps 2x double-buffered x/out tiles well under v7x's
    # 64 MiB VMEM for typical hidden sizes; raise for v5e/v6e if desired.
    tile_n = _round_up(max(8, min(tile_n, _round_up(n, 8))), 8)
    n_pad = _round_up(n, tile_n)
    if n_pad != n:
        x2d = jnp.pad(x2d, ((0, n_pad - n), (0, 0)))

    # Lane-dense output: pad tag dim to a multiple of 128 with zero columns.
    t_pad = _round_up(tag_size, 128)
    if t_pad != tag_size:
        w2 = jnp.pad(w2, ((0, 0), (0, t_pad - tag_size)))
        b2 = jnp.pad(b2, ((0, 0), (0, t_pad - tag_size)))

    xc = x2d.astype(compute_dtype)
    w1c = w1.astype(compute_dtype)
    w2c = w2.astype(compute_dtype)
    b1f = b1.astype(jnp.float32)
    b2f = b2.astype(jnp.float32)

    grid = (n_pad // tile_n,)

    flops = 2 * n_pad * hidden * h2 + 2 * n_pad * h2 * t_pad
    bytes_accessed = (xc.size * xc.dtype.itemsize
                      + w1c.size * w1c.dtype.itemsize
                      + w2c.size * w2c.dtype.itemsize
                      + b1f.size * 4 + b2f.size * 4
                      + n_pad * t_pad * 4)

    out2d = pl.pallas_call(
        _mlp_kernel,
        out_shape=jax.ShapeDtypeStruct((n_pad, t_pad), jnp.float32),
        grid_spec=pltpu.PrefetchScalarGridSpec(
            num_scalar_prefetch=0,
            grid=grid,
            in_specs=[
                pl.BlockSpec((tile_n, hidden), lambda i: (i, 0)),
                pl.BlockSpec((hidden, h2), lambda i: (0, 0)),   # VMEM-resident
                pl.BlockSpec((1, h2), lambda i: (0, 0)),
                pl.BlockSpec((h2, t_pad), lambda i: (0, 0)),
                pl.BlockSpec((1, t_pad), lambda i: (0, 0)),
            ],
            out_specs=pl.BlockSpec((tile_n, t_pad), lambda i: (i, 0)),
        ),
        compiler_params=pltpu.CompilerParams(
            dimension_semantics=("parallel",),
            vmem_limit_bytes=48 * 1024 * 1024,   # headroom; < v7x 64 MiB physical
        ),
        cost_estimate=pl.CostEstimate(
            flops=flops, transcendentals=0, bytes_accessed=bytes_accessed),
    )(xc, w1c, b1f, w2c, b2f)

    out2d = out2d[:n, :tag_size]
    return out2d.reshape(*lead, tag_size)


def init_params(key, hidden_size, tag_size):
    """Deterministic synthetic params matching nn.Linear shapes.

    PyTorch nn.Linear stores weight as [out, in] and computes y = x @ W.T + b.
    We store the transposed layout [in, out] so the kernel does plain x @ W.
    """
    k1, k2, k3, k4 = jax.random.split(key, 4)
    h2 = hidden_size // 2
    w1 = jax.random.normal(k1, (hidden_size, h2), jnp.float32) * 0.1
    b1 = jax.random.normal(k2, (1, h2), jnp.float32) * 0.1
    w2 = jax.random.normal(k3, (h2, tag_size), jnp.float32) * 0.1
    b2 = jax.random.normal(k4, (1, tag_size), jnp.float32) * 0.1
    return w1, b1, w2, b2


if __name__ == "__main__":
    batch, seq, hidden, tag_size = 2, 8, 32, 6
    key = jax.random.PRNGKey(0)
    kx, kp = jax.random.split(key)
    x = jax.random.normal(kx, (batch, seq, hidden), jnp.float32)
    w1, b1, w2, b2 = init_params(kp, hidden, tag_size)

    out = multi_nonlinear_classifier(x, w1, b1, w2, b2)
    out = jax.block_until_ready(out)

    # Pure-JAX f32 reference (eval-mode dropout == identity). Kernel uses bf16
    # MXU operands with f32 accumulation, so compare with bf16-level tolerance.
    ref = jnp.maximum(x.reshape(-1, hidden) @ w1 + b1, 0.0) @ w2 + b2
    ref = ref.reshape(batch, seq, tag_size)
    assert out.shape == (batch, seq, tag_size)
    assert jnp.allclose(out, ref, atol=2e-2, rtol=2e-2)

    print("KERNEL_OK")
</pallas_src>

<mosaic_0001>
module attributes {stable_mosaic.version = 11 : i64} {
  func.func @_mlp_kernel(%arg0: i32, %arg1: memref<16x32xbf16, #tpu.memory_space<vmem>>, %arg2: memref<32x16xbf16, #tpu.memory_space<vmem>>, %arg3: memref<1x16xf32, #tpu.memory_space<vmem>>, %arg4: memref<16x128xbf16, #tpu.memory_space<vmem>>, %arg5: memref<1x128xf32, #tpu.memory_space<vmem>>, %arg6: memref<16x128xf32, #tpu.memory_space<vmem>>) attributes {dimension_semantics = [#tpu.dimension_semantics<parallel>], iteration_bounds = array<i64: 1>, scalar_prefetch = 0 : i64, scratch_operands = 0 : i64, tpu.core_type = #tpu.core_type<tc>, window_params = [{transform_indices = @transform_0, window_bounds = array<i64: 16, 32>}, {pipeline_mode = #tpu.pipeline_mode<synchronous>, transform_indices = @transform_1, window_bounds = array<i64: 32, 16>}, {pipeline_mode = #tpu.pipeline_mode<synchronous>, transform_indices = @transform_2, window_bounds = array<i64: 1, 16>}, {pipeline_mode = #tpu.pipeline_mode<synchronous>, transform_indices = @transform_3, window_bounds = array<i64: 16, 128>}, {pipeline_mode = #tpu.pipeline_mode<synchronous>, transform_indices = @transform_4, window_bounds = array<i64: 1, 128>}, {transform_indices = @transform_5, window_bounds = array<i64: 16, 128>}]} {
    %c0 = arith.constant 0 : index
    %c0_0 = arith.constant 0 : index
    %0 = vector.load %arg1[%c0, %c0_0] : memref<16x32xbf16, #tpu.memory_space<vmem>>, vector<16x32xbf16>
    %c0_1 = arith.constant 0 : index
    %c0_2 = arith.constant 0 : index
    %1 = vector.load %arg2[%c0_1, %c0_2] : memref<32x16xbf16, #tpu.memory_space<vmem>>, vector<32x16xbf16>
    %cst = arith.constant dense<0.000000e+00> : vector<16x16xf32>
    %2 = tpu.matmul %0, %1, %cst {dimension_numbers = #tpu.dot_dimension_numbers<[1], [0], [0], [1], [0, 0, 1, 1], [], []>} : vector<16x32xbf16>, vector<32x16xbf16>, vector<16x16xf32> -> vector<16x16xf32>
    %c0_3 = arith.constant 0 : index
    %c0_4 = arith.constant 0 : index
    %3 = vector.load %arg3[%c0_3, %c0_4] : memref<1x16xf32, #tpu.memory_space<vmem>>, vector<1x16xf32>
    %4 = vector.broadcast %3 : vector<1x16xf32> to vector<16x16xf32>
    %5 = arith.addf %2, %4 : vector<16x16xf32>
    %cst_5 = arith.constant 0.000000e+00 : f32
    %6 = vector.broadcast %cst_5 : f32 to vector<16x16xf32>
    %7 = arith.maximumf %5, %6 : vector<16x16xf32>
    %8 = arith.truncf %7 : vector<16x16xf32> to vector<16x16xbf16>
    %c0_6 = arith.constant 0 : index
    %c0_7 = arith.constant 0 : index
    %9 = vector.load %arg4[%c0_6, %c0_7] : memref<16x128xbf16, #tpu.memory_space<vmem>>, vector<16x128xbf16>
    %cst_8 = arith.constant dense<0.000000e+00> : vector<16x128xf32>
    %10 = tpu.matmul %8, %9, %cst_8 {dimension_numbers = #tpu.dot_dimension_numbers<[1], [0], [0], [1], [0, 0, 1, 1], [], []>} : vector<16x16xbf16>, vector<16x128xbf16>, vector<16x128xf32> -> vector<16x128xf32>
    %c0_9 = arith.constant 0 : index
    %c0_10 = arith.constant 0 : index
    %11 = vector.load %arg5[%c0_9, %c0_10] : memref<1x128xf32, #tpu.memory_space<vmem>>, vector<1x128xf32>
    %12 = vector.broadcast %11 : vector<1x128xf32> to vector<16x128xf32>
    %13 = arith.addf %10, %12 : vector<16x128xf32>
    %c0_11 = arith.constant 0 : index
    %c0_12 = arith.constant 0 : index
    %14 = vector.load %arg6[%c0_11, %c0_12] : memref<16x128xf32, #tpu.memory_space<vmem>>, vector<16x128xf32>
    tpu.vector_store %arg6[%c0_11, %c0_12], %13 {strides = array<i32>} : memref<16x128xf32, #tpu.memory_space<vmem>>, vector<16x128xf32>,
    return
  }
  func.func @transform_0(%arg0: i32) -> (i32, i32) {
    %c0_i32 = arith.constant 0 : i32
    %c0_i32_0 = arith.constant 0 : i32
    return %arg0, %c0_i32 : i32, i32
  }
  func.func @transform_1(%arg0: i32) -> (i32, i32) {
    %c0_i32 = arith.constant 0 : i32
    %c0_i32_0 = arith.constant 0 : i32
    %c0_i32_1 = arith.constant 0 : i32
    return %c0_i32, %c0_i32_0 : i32, i32
  }
  func.func @transform_2(%arg0: i32) -> (i32, i32) {
    %c0_i32 = arith.constant 0 : i32
    %c0_i32_0 = arith.constant 0 : i32
    %c0_i32_1 = arith.constant 0 : i32
    return %c0_i32, %c0_i32_0 : i32, i32
  }
  func.func @transform_3(%arg0: i32) -> (i32, i32) {
    %c0_i32 = arith.constant 0 : i32
    %c0_i32_0 = arith.constant 0 : i32
    %c0_i32_1 = arith.constant 0 : i32
    return %c0_i32, %c0_i32_0 : i32, i32
  }
  func.func @transform_4(%arg0: i32) -> (i32, i32) {
    %c0_i32 = arith.constant 0 : i32
    %c0_i32_0 = arith.constant 0 : i32
    %c0_i32_1 = arith.constant 0 : i32
    return %c0_i32, %c0_i32_0 : i32, i32
  }
  func.func @transform_5(%arg0: i32) -> (i32, i32) {
    %c0_i32 = arith.constant 0 : i32
    %c0_i32_0 = arith.constant 0 : i32
    return %arg0, %c0_i32 : i32, i32
  }
}

</mosaic_0001>

<llo_original>
// kernel: tpu_custom_call.1
$region0: #{tpu_custom_call.1}
  #allocation0 [shape = 'u32[]', space=smem, size = 0x4, offset = 0x4, fixed_abs, tag = 'smem constant byte address 0x4 - core index']
  #allocation1 [shape = 'u32[144,128]{1,0:T(1,128)}', space=vmem, size = 0x12000, scoped, tag = 'internal scratch']
  %s0 = inlined_call_operand.vmem [shape: bf16[16,32], index: 0, kind: input, shape index: {}]
  %s1 = inlined_call_operand.vmem [shape: bf16[32,16], index: 1, kind: input, shape index: {}]
  %s2 = inlined_call_operand.vmem [shape: f32[1,16], index: 2, kind: input, shape index: {}]
  %s3 = inlined_call_operand.vmem [shape: bf16[16,128], index: 3, kind: input, shape index: {}]
  %s4 = inlined_call_operand.vmem [shape: f32[1,128], index: 4, kind: input, shape index: {}]
  %s5 = inlined_call_operand.hbm [shape: f32[16,128], index: 5, kind: output, shape index: {}]
  %s6 = sld [smem:[#allocation0]]
  $region30: #{tpu_custom_call.1} parent=0
    _
  %s8 = ssub.s32 1, %s6
  %s9 = scalar_select 0, %s8, %s6
  $region1: #{tpu_custom_call.1} parent=0
    #allocation2 [shape = 'u8[8192]{0}', space=vmem, size = 0x2000, scoped, tag = 'output window, operand 0, single buffered']
    #allocation3 [shape = 's32[1]{0}', space=sflag, size = 0x4, scoped, tag = 'scoped memory for tpu_custom_call.1']
    %10 = vsyncpa [#allocation3], 0
    // Predicated region
    $region2: #{tpu_custom_call.1} parent=1 // pred_check
      _
    $region3: #{tpu_custom_call.1} parent=1 // pred_check_branch
      %12 = sbr.rel (0) target = $region5
    $region4: #{tpu_custom_call.1} parent=1 // pred_region
      _
    $region5: #{tpu_custom_call.1} parent=1 // pred_fallthru
      _
    // Predicated region
    $region6: #{tpu_custom_call.1} parent=1 // pred_check
      _
    $region7: #{tpu_custom_call.1} parent=1 // pred_check_branch
      %14 = sbr.rel (0) target = $region9
    $region8: #{tpu_custom_call.1} parent=1 // pred_region
      _
    $region9: #{tpu_custom_call.1} parent=1 // pred_fallthru
      _
    // Predicated region
    $region10: #{tpu_custom_call.1} parent=1 // pred_check
      _
    $region11: #{tpu_custom_call.1} parent=1 // pred_check_branch
      %16 = sbr.rel (0) target = $region13
    $region12: #{tpu_custom_call.1} parent=1 // pred_region
      _
    $region13: #{tpu_custom_call.1} parent=1 // pred_fallthru
      _
    // Predicated region
    $region14: #{tpu_custom_call.1} parent=1 // pred_check
      _
    $region15: #{tpu_custom_call.1} parent=1 // pred_check_branch
      %18 = sbr.rel (0) target = $region17
    $region16: #{tpu_custom_call.1} parent=1 // pred_region
      _
    $region17: #{tpu_custom_call.1} parent=1 // pred_fallthru
      _
    // Predicated region
    $region18: #{tpu_custom_call.1} parent=1 // pred_check
      _
    $region19: #{tpu_custom_call.1} parent=1 // pred_check_branch
      %20 = sbr.rel (0) target = $region21
    $region20: #{tpu_custom_call.1} parent=1 // pred_region
      _
    $region21: #{tpu_custom_call.1} parent=1 // pred_fallthru
      _
    %v22 = vld [vmem:[%s0] sm:$0xf]
    %v23 = vld [vmem:[%s0 + $0x4] sm:$0xf]
    %v24 = vld [vmem:[%s1] sm:$0xf]
    %v25 = vld [vmem:[%s1 + $0x4] sm:$0xf]
    %v26 = vld [vmem:[%s1 + $0x8] sm:$0xf]
    %v27 = vld [vmem:[%s1 + $0xc] sm:$0xf]
    %v28 = vld [vmem:[%s2] sm:$0x1]
    %v30 = vlaneseq
    %v31 = vshrl.u32 %v30, 7
    %v32 = vsub.s32 0, %v31
    %v33 = vrot.slane %v28, %v32
    %v37 = vunpack.c.l.b16 %v22
    %v38 = vunpack.c.l.b16 %v23
    %v39 = vpack.c.b16 %v38, %v37
    %v44 = vunpack.c.l.b16 %v24
    %v45 = vunpack.c.l.b16 %v25
    %v46 = vunpack.c.l.b16 %v26
    %v47 = vunpack.c.l.b16 %v27
    %v48 = vpack.c.b16 %v45, %v44
    %v49 = vpack.c.b16 %v47, %v46
    %vm52 = vcmask 261120
    %v54 = vsel %vm52, %v39, 0
    %56 = vmatprep.subr.bf16.mxu0 0
    %57 = vmatpush1.bf16.msra.mxu0 0
    %58 = vmatprep.subr.bf16.mxu0 0
    %59 = vmatpush1.bf16.msra.mxu0 0
    %60 = vmatprep.subr.bf16.mxu0 0
    %61 = vmatpush1.bf16.msra.mxu0 0
    %62 = vmatprep.subr.bf16.mxu0 0
    %63 = vmatpush1.bf16.msra.mxu0 0
    %64 = vmatprep.subr.bf16.mxu0 0
    %65 = vmatpush1.bf16.msra.mxu0 0
    %66 = vmatprep.subr.bf16.mxu0 0
    %67 = vmatpush1.bf16.msra.mxu0 0
    %68 = vmatprep.subr.bf16.mxu0 0
    %69 = vmatpush1.bf16.msra.mxu0 %v49
    %70 = vmatprep.subr.bf16.mxu0 0
    %71 = vmatpush1.bf16.msra.mxu0 %v48
    %72 = vmatprep.subr.bf16.mxu0 0
    %73 = vmatpush2.bf16.msra.mxu0 0
    %74 = vmatprep.subr.bf16.mxu0 0
    %75 = vmatpush2.bf16.msra.mxu0 0
    %76 = vmatprep.subr.bf16.mxu0 0
    %77 = vmatpush2.bf16.msra.mxu0 0
    %78 = vmatprep.subr.bf16.mxu0 0
    %79 = vmatpush2.bf16.msra.mxu0 0
    %80 = vmatprep.subr.bf16.mxu0 0
    %81 = vmatpush2.bf16.msra.mxu0 0
    %82 = vmatprep.subr.bf16.mxu0 0
    %83 = vmatpush2.bf16.msra.mxu0 0
    %84 = vmatprep.subr.bf16.mxu0 0
    %85 = vmatpush2.bf16.msra.mxu0 0
    %86 = vmatprep.subr.bf16.mxu0 0
    %87 = vmatpush2.bf16.msra.mxu0 0
    %88 = vmatprep.mubr.bf16.mxu0 0
    %89 = vmatmul.mubr.bf16.gmra.mxu0 %v54
    %v90 = vpop.f32.mrf.mxu0
    %v91 = vadd.f32 %v33, %v90
    %v92 = vpop.f32.mrf.mxu0
    %v93 = vpop.f32.mrf.mxu0
    %v94 = vadd.f32 %v33, %v93
    %v95 = vpop.f32.mrf.mxu0
    %96 = vdwg.mxu0
    %v97 = vmax.f32 %v91, 0.0
    %v98 = vmax.f32 %v94, 0.0
    %v99 = vpack.c.bf16 %v98, %v97
    %v100 = vld [vmem:[%s3] sm:$0xf]
    %v101 = vld [vmem:[%s3 + $0x4] sm:$0xf]
    %v102 = vld [vmem:[%s4] sm:$0x1]
    %v104 = vlaneseq
    %v105 = vshrl.u32 %v104, 7
    %v106 = vsub.s32 0, %v105
    %v107 = vrot.slane %v102, %v106
    %v111 = vunpack.c.l.b16 %v100
    %v112 = vunpack.c.l.b16 %v101
    %v113 = vpack.c.b16 %v112, %v111
    %vm115 = vcmask 130048
    %v117 = vsel %vm115, %v99, 0
    %119 = vmatprep.subr.bf16.mxu0 0
    %120 = vmatpush1.bf16.msra.mxu0 0
    %121 = vmatprep.subr.bf16.mxu0 0
    %122 = vmatpush1.bf16.msra.mxu0 0
    %123 = vmatprep.subr.bf16.mxu0 0
    %124 = vmatpush1.bf16.msra.mxu0 0
    %125 = vmatprep.subr.bf16.mxu0 0
    %126 = vmatpush1.bf16.msra.mxu0 0
    %127 = vmatprep.subr.bf16.mxu0 0
    %128 = vmatpush1.bf16.msra.mxu0 0
    %129 = vmatprep.subr.bf16.mxu0 0
    %130 = vmatpush1.bf16.msra.mxu0 0
    %131 = vmatprep.subr.bf16.mxu0 0
    %132 = vmatpush1.bf16.msra.mxu0 0
    %133 = vmatprep.subr.bf16.mxu0 0
    %134 = vmatpush1.bf16.msra.mxu0 %v113
    %135 = vmatprep.subr.bf16.mxu0 0
    %136 = vmatpush2.bf16.msra.mxu0 0
    %137 = vmatprep.subr.bf16.mxu0 0
    %138 = vmatpush2.bf16.msra.mxu0 0
    %139 = vmatprep.subr.bf16.mxu0 0
    %140 = vmatpush2.bf16.msra.mxu0 0
    %141 = vmatprep.subr.bf16.mxu0 0
    %142 = vmatpush2.bf16.msra.mxu0 0
    %143 = vmatprep.subr.bf16.mxu0 0
    %144 = vmatpush2.bf16.msra.mxu0 0
    %145 = vmatprep.subr.bf16.mxu0 0
    %146 = vmatpush2.bf16.msra.mxu0 0
    %147 = vmatprep.subr.bf16.mxu0 0
    %148 = vmatpush2.bf16.msra.mxu0 0
    %149 = vmatprep.subr.bf16.mxu0 0
    %150 = vmatpush2.bf16.msra.mxu0 0
    %151 = vmatprep.mubr.bf16.mxu0 0
    %152 = vmatmul.mubr.bf16.gmra.mxu0 %v117
    %v153 = vpop.f32.mrf.mxu0
    %v154 = vadd.f32 %v107, %v153
    %v155 = vpop.f32.mrf.mxu0
    %v156 = vpop.f32.mrf.mxu0
    %v157 = vadd.f32 %v107, %v156
    %v158 = vpop.f32.mrf.mxu0
    %159 = vdwg.mxu0
    %160 = vst [vmem:[#allocation2] sm:$0xff] %v154
    %161 = vst [vmem:[#allocation2 + $0x8] sm:$0xff] %v157
    // Predicated region
    $region22: #{tpu_custom_call.1} parent=1 // pred_check
      _
    $region23: #{tpu_custom_call.1} parent=1 // pred_check_branch
      %163 = sbr.rel (0) target = $region25
    $region24: #{tpu_custom_call.1} parent=1 // pred_region
      %s165 = ssub.s32 256, 256
      %166 = vsyncadd [#allocation3], %s165
      %s167 = sshll.u32 [#allocation2], 4
      %s168 = int_to_ptr.vmem [resolvable:$true] %s167
      %173 = dma.vmem_to_hbm [thread:$0]  %s168, 256, %s5, [#allocation3], 128, 128, 8
    $region25: #{tpu_custom_call.1} parent=1 // pred_fallthru
      _
    // Predicated region
    $region26: #{tpu_custom_call.1} parent=1 // pred_check
      _
    $region27: #{tpu_custom_call.1} parent=1 // pred_check_branch
      %175 = sbr.rel (0) target = $region29
    $region28: #{tpu_custom_call.1} parent=1 // pred_region
      %176 = dma.done [#allocation3], 256
    $region29: #{tpu_custom_call.1} parent=1 // pred_fallthru
      _
    %177 = vsyncpa [#allocation3], 1

</llo_original>
